<compile_context>
chip_gen: v5e
topology: v5e:2x2
jax: 0.10.0
libtpu: 0.0.40
codegen_flags: <defaults>
</compile_context>

<pallas_src>
import functools

import jax
import jax.numpy as jnp
from jax.experimental import pallas as pl
from jax.experimental.pallas import tpu as pltpu


def _round_up(x: int, m: int) -> int:
    return ((x + m - 1) // m) * m


# ---------------------------------------------------------------------------
# Kernels
# ---------------------------------------------------------------------------
def _make_fused_kernel(num_layers: int):
    """Kernel for num_layers >= 2.  grid = (batch_tile i, layer l)."""
    n_mid = num_layers - 2

    def kernel(*refs):
        if n_mid > 0:
            (x_ref, wf_ref, bf_ref, wm_ref, bm_ref,
             wl_ref, bl_ref, o_ref, act_ref) = refs
        else:
            (x_ref, wf_ref, bf_ref, wl_ref, bl_ref, o_ref, act_ref) = refs

        l = pl.program_id(1)
        last = pl.num_programs(1) - 1

        # Layer 0: input (din_pad) -> hidden (dh_pad), ReLU, keep resident.
        @pl.when(l == 0)
        def _():
            y = jnp.dot(x_ref[...].astype(wf_ref.dtype), wf_ref[...],
                        preferred_element_type=jnp.float32)
            y = y + bf_ref[...].astype(jnp.float32)
            act_ref[...] = jnp.maximum(y, 0.0).astype(act_ref.dtype)

        # Hidden layers: hidden -> hidden, ReLU, keep resident.
        if n_mid > 0:
            @pl.when(jnp.logical_and(l > 0, l < last))
            def _():
                y = jnp.dot(act_ref[...], wm_ref[0],
                            preferred_element_type=jnp.float32)
                y = y + bm_ref[0].astype(jnp.float32)
                act_ref[...] = jnp.maximum(y, 0.0).astype(act_ref.dtype)

        # Last layer: hidden -> output (dout_pad lanes only), no ReLU.
        @pl.when(l == last)
        def _():
            y = jnp.dot(act_ref[...], wl_ref[...],
                        preferred_element_type=jnp.float32)
            y = y + bl_ref[...].astype(jnp.float32)
            o_ref[...] = y.astype(o_ref.dtype)

    return kernel


def _single_layer_kernel(x_ref, w_ref, b_ref, o_ref):
    """num_layers == 1: one linear layer, no ReLU."""
    y = jnp.dot(x_ref[...].astype(w_ref.dtype), w_ref[...],
                preferred_element_type=jnp.float32)
    o_ref[...] = (y + b_ref[...].astype(jnp.float32)).astype(o_ref.dtype)


# ---------------------------------------------------------------------------
# Setup-time packing: PyTorch-layout params -> per-layer padded, pre-transposed
# arrays.  Done once, outside the forward path.
# ---------------------------------------------------------------------------
def pack_mlp_params(params, *, lane: int = 128, param_dtype=None):
    """params: list of (w [out, in], b [out]) as in nn.Linear.

    param_dtype: None keeps the original dtype (exact parity); jnp.bfloat16
    halves weight HBM traffic / VMEM and uses the fast MXU path on v6e/v7x.

    Returns (weights, meta) where
      weights = (w_first, b_first, w_mid, b_mid, w_last, b_last)  (Nones where
      a group does not exist) and meta holds the static padded dims.
    """
    num_layers = len(params)
    dtype = jnp.dtype(param_dtype) if param_dtype is not None else params[0][0].dtype

    d_in = params[0][0].shape[1]
    d_out = params[-1][0].shape[0]
    din_pad = _round_up(d_in, lane)
    dout_pad = _round_up(d_out, lane)

    if num_layers == 1:
        w, b = params[0]
        w_last = jnp.zeros((din_pad, dout_pad), dtype).at[:d_in, :d_out].set(
            w.T.astype(dtype))
        b_last = jnp.zeros((1, dout_pad), dtype).at[0, :d_out].set(b.astype(dtype))
        weights = (None, None, None, None, w_last, b_last)
        meta = dict(num_layers=1, d_out=d_out, din_pad=din_pad, dh_pad=0,
                    dout_pad=dout_pad)
        return weights, meta

    d_hid = params[0][0].shape[0]
    dh_pad = _round_up(d_hid, lane)

    w0, b0 = params[0]
    w_first = jnp.zeros((din_pad, dh_pad), dtype).at[:d_in, :d_hid].set(
        w0.T.astype(dtype))
    b_first = jnp.zeros((1, dh_pad), dtype).at[0, :d_hid].set(b0.astype(dtype))

    n_mid = num_layers - 2
    if n_mid > 0:
        w_mid = jnp.zeros((n_mid, dh_pad, dh_pad), dtype)
        b_mid = jnp.zeros((n_mid, 1, dh_pad), dtype)
        for j in range(n_mid):
            w, b = params[1 + j]
            w_mid = w_mid.at[j, :d_hid, :d_hid].set(w.T.astype(dtype))
            b_mid = b_mid.at[j, 0, :d_hid].set(b.astype(dtype))
    else:
        w_mid = b_mid = None

    wl, bl = params[-1]
    w_last = jnp.zeros((dh_pad, dout_pad), dtype).at[:d_hid, :d_out].set(
        wl.T.astype(dtype))
    b_last = jnp.zeros((1, dout_pad), dtype).at[0, :d_out].set(bl.astype(dtype))

    weights = (w_first, b_first, w_mid, b_mid, w_last, b_last)
    meta = dict(num_layers=num_layers, d_out=d_out, din_pad=din_pad,
                dh_pad=dh_pad, dout_pad=dout_pad)
    return weights, meta


# ---------------------------------------------------------------------------
# Forward pass: one fused pallas_call for the whole MLP.
# ---------------------------------------------------------------------------
def _blk_bytes(rows, cols, itemsize):
    return _round_up(rows, 8) * _round_up(cols, 128) * itemsize


def _vmem_limit(est_bytes):
    try:
        cap = pltpu.get_tpu_info().vmem_capacity_bytes
    except Exception:  # pragma: no cover - conservative fallback
        cap = 64 * 1024 * 1024
    usable = max(cap - 16 * 1024 * 1024, 32 * 1024 * 1024)
    return int(min(max(2 * est_bytes, 32 * 1024 * 1024), usable))


def mlp_forward(x, w_first, b_first, w_mid, b_mid, w_last, b_last, *,
                num_layers, d_out, din_pad, dh_pad, dout_pad,
                block_batch=256):
    B, d_in = x.shape
    w_dtype = w_last.dtype
    w_bytes = jnp.dtype(w_dtype).itemsize
    x_bytes = jnp.dtype(x.dtype).itemsize

    # bf16 activation scratch when params are bf16 (halves act VMEM / MXU vld
    # bytes on v6e/v7x); f32 otherwise.  Matmul accumulation is always f32.
    act_dtype = jnp.float32 if w_dtype == jnp.float32 else w_dtype
    act_bytes = jnp.dtype(act_dtype).itemsize

    # Sub-32-bit dtypes pack along sublanes -> use 16-row multiples; 8 for f32.
    sub = 8 if min(x_bytes, w_bytes, act_bytes) >= 4 else 16

    # Balanced batch tiling: as big as block_batch allows (weight re-streaming
    # and per-step overhead scale with the number of batch tiles).
    nb = max(-(-B // block_batch), 1)
    tb = _round_up(-(-B // nb), sub)
    b_pad = tb * nb

    # Zero-pad input once at the boundary (padded rows/lanes stay harmless).
    x_pad = jnp.zeros((b_pad, din_pad), x.dtype).at[:B, :d_in].set(x)

    if num_layers == 1:
        est = 2 * (_blk_bytes(tb, din_pad, x_bytes)
                   + _blk_bytes(tb, dout_pad, x_bytes)
                   + _blk_bytes(din_pad, dout_pad, w_bytes)
                   + _blk_bytes(1, dout_pad, w_bytes))
        out_padded = pl.pallas_call(
            _single_layer_kernel,
            out_shape=jax.ShapeDtypeStruct((b_pad, dout_pad), x.dtype),
            grid=(nb,),
            in_specs=[
                pl.BlockSpec((tb, din_pad), lambda i: (i, 0)),
                pl.BlockSpec((din_pad, dout_pad), lambda i: (0, 0)),
                pl.BlockSpec((1, dout_pad), lambda i: (0, 0)),
            ],
            out_specs=pl.BlockSpec((tb, dout_pad), lambda i: (i, 0)),
            compiler_params=pltpu.CompilerParams(
                dimension_semantics=("parallel",),
                vmem_limit_bytes=_vmem_limit(est),
            ),
        )(x_pad, w_last, b_last)
        return out_padded[:B, :d_out]

    n_mid = num_layers - 2

    # VMEM budget from the chosen blocks (x2 for pipeline double-buffering,
    # counted generously even for the resident first/last weights).
    est = (2 * _blk_bytes(tb, din_pad, x_bytes)             # x blocks
           + 2 * _blk_bytes(tb, dout_pad, x_bytes)          # out blocks
           + _blk_bytes(tb, dh_pad, act_bytes)              # activation scratch
           + 2 * (_blk_bytes(din_pad, dh_pad, w_bytes)
                  + _blk_bytes(1, dh_pad, w_bytes))         # first layer
           + 2 * (_blk_bytes(dh_pad, dout_pad, w_bytes)
                  + _blk_bytes(1, dout_pad, w_bytes)))      # last layer
    if n_mid > 0:
        est += 2 * (_blk_bytes(dh_pad, dh_pad, w_bytes)
                    + _blk_bytes(1, dh_pad, w_bytes))       # streamed mid layers

    in_specs = [
        pl.BlockSpec((tb, din_pad), lambda i, l: (i, 0)),       # x (per tile)
        pl.BlockSpec((din_pad, dh_pad), lambda i, l: (0, 0)),   # W_first (resident)
        pl.BlockSpec((1, dh_pad), lambda i, l: (0, 0)),         # b_first (resident)
    ]
    args = [x_pad, w_first, b_first]
    if n_mid > 0:
        # clip(l-1): mid block 0 is prefetched during the first-layer step and
        # the last step re-uses the previous block index (no extra DMA).
        in_specs += [
            pl.BlockSpec((1, dh_pad, dh_pad),
                         lambda i, l: (jnp.clip(l - 1, 0, n_mid - 1), 0, 0)),
            pl.BlockSpec((1, 1, dh_pad),
                         lambda i, l: (jnp.clip(l - 1, 0, n_mid - 1), 0, 0)),
        ]
        args += [w_mid, b_mid]
    in_specs += [
        pl.BlockSpec((dh_pad, dout_pad), lambda i, l: (0, 0)),  # W_last (resident)
        pl.BlockSpec((1, dout_pad), lambda i, l: (0, 0)),       # b_last (resident)
    ]
    args += [w_last, b_last]

    out_padded = pl.pallas_call(
        _make_fused_kernel(num_layers),
        out_shape=jax.ShapeDtypeStruct((b_pad, dout_pad), x.dtype),
        grid=(nb, num_layers),
        in_specs=in_specs,
        out_specs=pl.BlockSpec((tb, dout_pad), lambda i, l: (i, 0)),
        scratch_shapes=[pltpu.VMEM((tb, dh_pad), act_dtype)],
        compiler_params=pltpu.CompilerParams(
            dimension_semantics=("parallel", "arbitrary"),
            vmem_limit_bytes=_vmem_limit(est),
        ),
    )(*args)

    return out_padded[:B, :d_out]


# ---------------------------------------------------------------------------
# Param init (mirrors nn.Linear: weight [out, in], bias [out]) and reference.
# ---------------------------------------------------------------------------
def init_mlp_params(key, input_dim, hidden_dim, output_dim, num_layers):
    if num_layers == 1:
        dims = [(input_dim, output_dim)]
    else:
        dims = [(input_dim, hidden_dim)]
        for _ in range(num_layers - 2):
            dims.append((hidden_dim, hidden_dim))
        dims.append((hidden_dim, output_dim))

    params = []
    for (din, dout) in dims:
        key, kw, kb = jax.random.split(key, 3)
        bound = 1.0 / jnp.sqrt(din)
        w = jax.random.uniform(kw, (dout, din), jnp.float32, -bound, bound)
        b = jax.random.uniform(kb, (dout,), jnp.float32, -bound, bound)
        params.append((w, b))
    return params


def mlp_reference(x, params):
    n = len(params)
    for i, (w, b) in enumerate(params):
        x = x @ w.T + b
        if i < n - 1:
            x = jnp.maximum(x, 0.0)
    return x


def _run_packed(x, params, param_dtype=None):
    weights, meta = pack_mlp_params(params, param_dtype=param_dtype)
    fwd = jax.jit(functools.partial(mlp_forward, **meta))
    out = fwd(x, *weights)
    return jax.block_until_ready(out)


if __name__ == "__main__":
    key = jax.random.PRNGKey(0)
    batch = 8
    input_dim = 32
    hidden_dim = 64
    output_dim = 16

    key, kx = jax.random.split(key)
    x = jax.random.normal(kx, (batch, input_dim), jnp.float32)

    # 3-layer MLP, exact f32 path.
    key, kp = jax.random.split(key)
    params3 = init_mlp_params(kp, input_dim, hidden_dim, output_dim, 3)
    out3 = _run_packed(x, params3)
    ref3 = mlp_reference(x, params3)
    assert out3.shape == (batch, output_dim)
    assert jnp.allclose(out3, ref3, atol=1e-4, rtol=1e-4), float(
        jnp.max(jnp.abs(out3 - ref3)))

    # Same MLP, bf16-packed weights (fast MXU path) -> looser tolerance.
    out3_bf16 = _run_packed(x, params3, param_dtype=jnp.bfloat16)
    assert out3_bf16.shape == (batch, output_dim)
    assert jnp.allclose(out3_bf16, ref3, atol=5e-2, rtol=5e-2), float(
        jnp.max(jnp.abs(out3_bf16 - ref3)))

    # 2-layer MLP (no mid stack) and 1-layer MLP (single-matmul path), f32.
    key, kp2 = jax.random.split(key)
    params2 = init_mlp_params(kp2, input_dim, hidden_dim, output_dim, 2)
    out2 = _run_packed(x, params2)
    ref2 = mlp_reference(x, params2)
    assert jnp.allclose(out2, ref2, atol=1e-4, rtol=1e-4), float(
        jnp.max(jnp.abs(out2 - ref2)))

    key, kp1 = jax.random.split(key)
    params1 = init_mlp_params(kp1, input_dim, hidden_dim, output_dim, 1)
    out1 = _run_packed(x, params1)
    ref1 = mlp_reference(x, params1)
    assert jnp.allclose(out1, ref1, atol=1e-4, rtol=1e-4), float(
        jnp.max(jnp.abs(out1 - ref1)))

    print("KERNEL_OK")
</pallas_src>

<mosaic_0001>
module attributes {stable_mosaic.version = 11 : i64} {
  func.func @kernel(%arg0: i32, %arg1: i32, %arg2: memref<8x128xf32, #tpu.memory_space<vmem>>, %arg3: memref<128x128xf32, #tpu.memory_space<vmem>>, %arg4: memref<1x128xf32, #tpu.memory_space<vmem>>, %arg5: memref<1x128x128xf32, #tpu.memory_space<vmem>>, %arg6: memref<1x1x128xf32, #tpu.memory_space<vmem>>, %arg7: memref<128x128xf32, #tpu.memory_space<vmem>>, %arg8: memref<1x128xf32, #tpu.memory_space<vmem>>, %arg9: memref<8x128xf32, #tpu.memory_space<vmem>>, %arg10: memref<8x128xf32, #tpu.memory_space<vmem>>) attributes {dimension_semantics = [#tpu.dimension_semantics<parallel>, #tpu.dimension_semantics<arbitrary>], iteration_bounds = array<i64: 1, 3>, scalar_prefetch = 0 : i64, scratch_operands = 1 : i64, tpu.core_type = #tpu.core_type<tc>, window_params = [{transform_indices = @transform_0, window_bounds = array<i64: 8, 128>}, {pipeline_mode = #tpu.pipeline_mode<synchronous>, transform_indices = @transform_1, window_bounds = array<i64: 128, 128>}, {pipeline_mode = #tpu.pipeline_mode<synchronous>, transform_indices = @transform_2, window_bounds = array<i64: 1, 128>}, {transform_indices = @transform_3, window_bounds = array<i64: 1, 128, 128>}, {transform_indices = @transform_4, window_bounds = array<i64: 1, 1, 128>}, {pipeline_mode = #tpu.pipeline_mode<synchronous>, transform_indices = @transform_5, window_bounds = array<i64: 128, 128>}, {pipeline_mode = #tpu.pipeline_mode<synchronous>, transform_indices = @transform_6, window_bounds = array<i64: 1, 128>}, {transform_indices = @transform_7, window_bounds = array<i64: 8, 128>}]} {
    %c0_i32 = arith.constant 0 : i32
    %0 = arith.cmpi eq, %arg1, %c0_i32 : i32
    %1 = arith.extui %0 : i1 to i32
    %c0_i32_0 = arith.constant 0 : i32
    %2 = arith.cmpi ne, %1, %c0_i32_0 : i32
    scf.if %2 {
      %c0 = arith.constant 0 : index
      %c0_5 = arith.constant 0 : index
      %11 = vector.load %arg2[%c0, %c0_5] : memref<8x128xf32, #tpu.memory_space<vmem>>, vector<8x128xf32>
      %c0_6 = arith.constant 0 : index
      %c0_7 = arith.constant 0 : index
      %12 = vector.load %arg3[%c0_6, %c0_7] : memref<128x128xf32, #tpu.memory_space<vmem>>, vector<128x128xf32>
      %cst = arith.constant dense<0.000000e+00> : vector<8x128xf32>
      %13 = tpu.matmul %11, %12, %cst {dimension_numbers = #tpu.dot_dimension_numbers<[1], [0], [0], [1], [0, 0, 1, 1], [], []>} : vector<8x128xf32>, vector<128x128xf32>, vector<8x128xf32> -> vector<8x128xf32>
      %c0_8 = arith.constant 0 : index
      %c0_9 = arith.constant 0 : index
      %14 = vector.load %arg4[%c0_8, %c0_9] : memref<1x128xf32, #tpu.memory_space<vmem>>, vector<1x128xf32>
      %15 = vector.broadcast %14 : vector<1x128xf32> to vector<8x128xf32>
      %16 = arith.addf %13, %15 : vector<8x128xf32>
      %cst_10 = arith.constant 0.000000e+00 : f32
      %17 = vector.broadcast %cst_10 : f32 to vector<8x128xf32>
      %18 = arith.maximumf %16, %17 : vector<8x128xf32>
      %c0_11 = arith.constant 0 : index
      %c0_12 = arith.constant 0 : index
      %19 = vector.load %arg10[%c0_11, %c0_12] : memref<8x128xf32, #tpu.memory_space<vmem>>, vector<8x128xf32>
      tpu.vector_store %arg10[%c0_11, %c0_12], %18 {strides = array<i32>} : memref<8x128xf32, #tpu.memory_space<vmem>>, vector<8x128xf32>,
    } else {
    }
    %c0_i32_1 = arith.constant 0 : i32
    %3 = arith.cmpi sgt, %arg1, %c0_i32_1 : i32
    %c2_i32 = arith.constant 2 : i32
    %4 = arith.cmpi slt, %arg1, %c2_i32 : i32
    %5 = arith.andi %3, %4 : i1
    %6 = arith.extui %5 : i1 to i32
    %c0_i32_2 = arith.constant 0 : i32
    %7 = arith.cmpi ne, %6, %c0_i32_2 : i32
    scf.if %7 {
      %c0 = arith.constant 0 : index
      %c0_5 = arith.constant 0 : index
      %11 = vector.load %arg10[%c0, %c0_5] : memref<8x128xf32, #tpu.memory_space<vmem>>, vector<8x128xf32>
      %c0_6 = arith.constant 0 : index
      %c0_7 = arith.constant 0 : index
      %c0_8 = arith.constant 0 : index
      %12 = vector.load %arg5[%c0_6, %c0_7, %c0_8] : memref<1x128x128xf32, #tpu.memory_space<vmem>>, vector<1x128x128xf32>
      %13 = vector.shape_cast %12 : vector<1x128x128xf32> to vector<128x128xf32>
      %cst = arith.constant dense<0.000000e+00> : vector<8x128xf32>
      %14 = tpu.matmul %11, %13, %cst {dimension_numbers = #tpu.dot_dimension_numbers<[1], [0], [0], [1], [0, 0, 1, 1], [], []>} : vector<8x128xf32>, vector<128x128xf32>, vector<8x128xf32> -> vector<8x128xf32>
      %c0_9 = arith.constant 0 : index
      %c0_10 = arith.constant 0 : index
      %c0_11 = arith.constant 0 : index
      %15 = vector.load %arg6[%c0_9, %c0_10, %c0_11] : memref<1x1x128xf32, #tpu.memory_space<vmem>>, vector<1x1x128xf32>
      %16 = vector.shape_cast %15 : vector<1x1x128xf32> to vector<1x128xf32>
      %17 = vector.broadcast %16 : vector<1x128xf32> to vector<8x128xf32>
      %18 = arith.addf %14, %17 : vector<8x128xf32>
      %cst_12 = arith.constant 0.000000e+00 : f32
      %19 = vector.broadcast %cst_12 : f32 to vector<8x128xf32>
      %20 = arith.maximumf %18, %19 : vector<8x128xf32>
      %c0_13 = arith.constant 0 : index
      %c0_14 = arith.constant 0 : index
      %21 = vector.load %arg10[%c0_13, %c0_14] : memref<8x128xf32, #tpu.memory_space<vmem>>, vector<8x128xf32>
      tpu.vector_store %arg10[%c0_13, %c0_14], %20 {strides = array<i32>} : memref<8x128xf32, #tpu.memory_space<vmem>>, vector<8x128xf32>,
    } else {
    }
    %c2_i32_3 = arith.constant 2 : i32
    %8 = arith.cmpi eq, %arg1, %c2_i32_3 : i32
    %9 = arith.extui %8 : i1 to i32
    %c0_i32_4 = arith.constant 0 : i32
    %10 = arith.cmpi ne, %9, %c0_i32_4 : i32
    scf.if %10 {
      %c0 = arith.constant 0 : index
      %c0_5 = arith.constant 0 : index
      %11 = vector.load %arg10[%c0, %c0_5] : memref<8x128xf32, #tpu.memory_space<vmem>>, vector<8x128xf32>
      %c0_6 = arith.constant 0 : index
      %c0_7 = arith.constant 0 : index
      %12 = vector.load %arg7[%c0_6, %c0_7] : memref<128x128xf32, #tpu.memory_space<vmem>>, vector<128x128xf32>
      %cst = arith.constant dense<0.000000e+00> : vector<8x128xf32>
      %13 = tpu.matmul %11, %12, %cst {dimension_numbers = #tpu.dot_dimension_numbers<[1], [0], [0], [1], [0, 0, 1, 1], [], []>} : vector<8x128xf32>, vector<128x128xf32>, vector<8x128xf32> -> vector<8x128xf32>
      %c0_8 = arith.constant 0 : index
      %c0_9 = arith.constant 0 : index
      %14 = vector.load %arg8[%c0_8, %c0_9] : memref<1x128xf32, #tpu.memory_space<vmem>>, vector<1x128xf32>
      %15 = vector.broadcast %14 : vector<1x128xf32> to vector<8x128xf32>
      %16 = arith.addf %13, %15 : vector<8x128xf32>
      %c0_10 = arith.constant 0 : index
      %c0_11 = arith.constant 0 : index
      %17 = vector.load %arg9[%c0_10, %c0_11] : memref<8x128xf32, #tpu.memory_space<vmem>>, vector<8x128xf32>
      tpu.vector_store %arg9[%c0_10, %c0_11], %16 {strides = array<i32>} : memref<8x128xf32, #tpu.memory_space<vmem>>, vector<8x128xf32>,
    } else {
    }
    return
  }
  func.func @transform_0(%arg0: i32, %arg1: i32) -> (i32, i32) {
    %c0_i32 = arith.constant 0 : i32
    %c0_i32_0 = arith.constant 0 : i32
    return %arg0, %c0_i32 : i32, i32
  }
  func.func @transform_1(%arg0: i32, %arg1: i32) -> (i32, i32) {
    %c0_i32 = arith.constant 0 : i32
    %c0_i32_0 = arith.constant 0 : i32
    %c0_i32_1 = arith.constant 0 : i32
    return %c0_i32, %c0_i32_0 : i32, i32
  }
  func.func @transform_2(%arg0: i32, %arg1: i32) -> (i32, i32) {
    %c0_i32 = arith.constant 0 : i32
    %c0_i32_0 = arith.constant 0 : i32
    %c0_i32_1 = arith.constant 0 : i32
    return %c0_i32, %c0_i32_0 : i32, i32
  }
  func.func @transform_3(%arg0: i32, %arg1: i32) -> (i32, i32, i32) {
    %c1_i32 = arith.constant 1 : i32
    %0 = arith.subi %arg1, %c1_i32 : i32
    %c0_i32 = arith.constant 0 : i32
    %c0_i32_0 = arith.constant 0 : i32
    %1 = arith.maxsi %c0_i32, %0 : i32
    %2 = arith.minsi %c0_i32_0, %1 : i32
    %c0_i32_1 = arith.constant 0 : i32
    %c0_i32_2 = arith.constant 0 : i32
    %c0_i32_3 = arith.constant 0 : i32
    return %2, %c0_i32_1, %c0_i32_2 : i32, i32, i32
  }
  func.func @transform_4(%arg0: i32, %arg1: i32) -> (i32, i32, i32) {
    %c1_i32 = arith.constant 1 : i32
    %0 = arith.subi %arg1, %c1_i32 : i32
    %c0_i32 = arith.constant 0 : i32
    %c0_i32_0 = arith.constant 0 : i32
    %1 = arith.maxsi %c0_i32, %0 : i32
    %2 = arith.minsi %c0_i32_0, %1 : i32
    %c0_i32_1 = arith.constant 0 : i32
    %c0_i32_2 = arith.constant 0 : i32
    %c0_i32_3 = arith.constant 0 : i32
    return %2, %c0_i32_1, %c0_i32_2 : i32, i32, i32
  }
  func.func @transform_5(%arg0: i32, %arg1: i32) -> (i32, i32) {
    %c0_i32 = arith.constant 0 : i32
    %c0_i32_0 = arith.constant 0 : i32
    %c0_i32_1 = arith.constant 0 : i32
    return %c0_i32, %c0_i32_0 : i32, i32
  }
  func.func @transform_6(%arg0: i32, %arg1: i32) -> (i32, i32) {
    %c0_i32 = arith.constant 0 : i32
    %c0_i32_0 = arith.constant 0 : i32
    %c0_i32_1 = arith.constant 0 : i32
    return %c0_i32, %c0_i32_0 : i32, i32
  }
  func.func @transform_7(%arg0: i32, %arg1: i32) -> (i32, i32) {
    %c0_i32 = arith.constant 0 : i32
    %c0_i32_0 = arith.constant 0 : i32
    return %arg0, %c0_i32 : i32, i32
  }
}

</mosaic_0001>

<llo_original>
// kernel: mlp_forward.1
$region0: #{mlp_forward.1}
  #allocation0 [shape = 'u32[]', space=smem, size = 0x4, offset = 0x4, fixed_abs, tag = 'smem constant byte address 0x4 - core index']
  #allocation1 [shape = 'u32[72,128]{1,0:T(1,128)}', space=vmem, size = 0x9000, scoped, tag = 'internal scratch']
  #allocation2 [shape = 'f32[8,128]{1,0:T(8,128)}', space=vmem, size = 0x1000, scoped, tag = 'scratch operand']
  %s0 = inlined_call_operand.vmem [shape: f32[8,128], index: 0, kind: input, shape index: {}]
  %s1 = inlined_call_operand.hbm [shape: f32[128,128], index: 1, kind: input, shape index: {}]
  %s2 = inlined_call_operand.vmem [shape: f32[1,128], index: 2, kind: input, shape index: {}]
  %s3 = inlined_call_operand.hbm [shape: f32[1,128,128], index: 3, kind: input, shape index: {}]
  %s4 = inlined_call_operand.vmem [shape: f32[1,1,128], index: 4, kind: input, shape index: {}]
  %s5 = inlined_call_operand.hbm [shape: f32[128,128], index: 5, kind: input, shape index: {}]
  %s6 = inlined_call_operand.vmem [shape: f32[1,128], index: 6, kind: input, shape index: {}]
  %s7 = inlined_call_operand.hbm [shape: f32[8,128], index: 7, kind: output, shape index: {}]
  %s8 = sld [smem:[#allocation0]]
  $region85: #{mlp_forward.1} parent=0
    _
  %s10 = ssub.s32 1, %s8
  %s11 = scalar_select 0, %s10, %s8
  $region1: #{mlp_forward.1} parent=0
    #allocation3 [shape = 'u8[65536]{0}', space=vmem, size = 0x10000, scoped, tag = 'input window, operand 1, single buffered']
    #allocation4 [shape = 's32[2]{0}', space=sflag, size = 0x8, scoped, tag = 'scoped memory for mlp_forward.1']
    #allocation5 [shape = 's32[2]{0}', space=sflag, size = 0x8, scoped, tag = 'scoped memory for mlp_forward.1']
    #allocation6 [shape = 'u8[131072]{0}', space=vmem, size = 0x20000, scoped, tag = 'input window, operand 3']
    #allocation7 [shape = 's32[2]{0}', space=sflag, size = 0x8, scoped, tag = 'scoped memory for mlp_forward.1']
    #allocation8 [shape = 'u8[65536]{0}', space=vmem, size = 0x10000, scoped, tag = 'input window, operand 5, single buffered']
    #allocation9 [shape = 'u8[4096]{0}', space=vmem, size = 0x1000, scoped, tag = 'output window, operand 0, single buffered']
    %12 = vsyncpa [#allocation4], 0
    %13 = vsyncpa [#allocation7], 0
    %s14 = scalar_lea.sflag [#allocation7], 1
    %15 = vsyncpa %s14, 0
    %16 = vsyncpa [#allocation5], 0
    loop: start=0, step=1, limit=5
    $region2: #{mlp_forward.1} parent=1 // loop_pre_header
      _
    $region3: #{mlp_forward.1} parent=1 // loop_header
      %s18 = sphi 0, %s22
      %p19 = scmp.ge.s32.totalorder %s18, 5
      %s25 = sphi 0, %s37
      %s26 = sphi 0, %s33
      %s27 = sphi 0, %s25
      %s28 = sphi 0, %s26
      %s29 = sphi 0, %s27
      %s30 = sphi 0, %s28
      %s40 = sphi 0, %s42
      %s43 = sphi 0, %s40
      %s44 = sphi 0, %s43
      %s60 = sphi 0, %s44
      %s64 = sphi 0, %s64
      %s66 = sphi 0, %s64
      %s67 = sphi 0, %s66
      %s81 = sphi 0, %s67
      %s85 = sphi 0, %s85
      %s87 = sphi 0, %s85
      %s88 = sphi 0, %s87
      %s102 = sphi 0, %s88
      %s118 = sphi 0, %s120
      %s121 = sphi 0, %s118
      %s122 = sphi 0, %s121
      %s138 = sphi 0, %s122
      %s154 = sphi 0, %s156
      %s157 = sphi 0, %s154
      %s158 = sphi 0, %s157
      %s174 = sphi 0, %s158
      %s178 = sphi 0, %s178
      %s180 = sphi 0, %s178
      %s181 = sphi 0, %s180
      %s195 = sphi 0, %s181
      %s199 = sphi 0, %s199
      %s201 = sphi 0, %s199
      %s202 = sphi 0, %s201
      %s216 = sphi 0, %s202
      %s222 = sphi 0, %s224
      %s225 = sphi 0, %s222
      %s226 = sphi 0, %s225
      %s242 = sphi 0, %s226
    $region4: #{mlp_forward.1} parent=1 // loop_header_branch
      %21 = sbr.rel (%p19) target = $region8
    $region5: #{mlp_forward.1} parent=1 // loop_body
      %s23 = ssub.s32 %s18, 1
      %s24 = ssub.s32 %s18, 2
      %s31 = sadd.s32 1, %s26
      %p32 = scmp.ge.s32.totalorder %s31, 3
      %s33 = scalar_select %p32, 0, %s31
      %s34 = sadd.s32 1, %s25
      %s35 = scalar_select %p32, %s34, %s25
      %p36 = scmp.ge.s32.totalorder %s35, 1
      %s37 = scalar_select %p36, 0, %s35
      %s38 = ssub.s32 %s25, %s37
      %p39 = scmp.eq.s32.totalorder %s38, 0
      %s41 = sadd.s32 %s40, 1
      %s42 = scalar_select %p39, %s40, %s41
      %p45 = pneg %p39
      %p46 = scmp.eq.s32.totalorder %s18, 2
      %p47 = por %p45, %p46
      %p48 = scmp.ne.s32.totalorder %s40, %s43
      %p49 = scmp.eq.s32.totalorder %s18, 0
      %p50 = por %p48, %p49
      %p51 = scmp.ne.s32.totalorder %s40, %s43
      %p52 = scmp.eq.s32.totalorder %s23, 2
      %p53 = por %p51, %p52
      %p54 = scmp.ne.s32.totalorder %s43, %s44
      %p55 = scmp.eq.s32.totalorder %s23, 0
      %p56 = por %p54, %p55
      %p57 = scmp.ne.s32.totalorder %s43, %s44
      %p58 = scmp.eq.s32.totalorder %s24, 2
      %p59 = por %p57, %p58
      %p61 = scmp.ne.s32.totalorder %s44, %s60
      %p62 = scmp.eq.s32.totalorder %s24, 0
      %p63 = por %p61, %p62
      %s65 = sadd.s32 %s64, 1
      %p68 = scmp.eq.s32.totalorder %s18, 2
      %p69 = scmp.ne.s32.totalorder %s64, %s66
      %p70 = scmp.eq.s32.totalorder %s18, 0
      %p71 = por %p69, %p70
      %p72 = scmp.ne.s32.totalorder %s64, %s66
      %p73 = scmp.eq.s32.totalorder %s23, 2
      %p74 = por %p72, %p73
      %p75 = scmp.ne.s32.totalorder %s66, %s67
      %p76 = scmp.eq.s32.totalorder %s23, 0
      %p77 = por %p75, %p76
      %p78 = scmp.ne.s32.totalorder %s66, %s67
      %p79 = scmp.eq.s32.totalorder %s24, 2
      %p80 = por %p78, %p79
      %p82 = scmp.ne.s32.totalorder %s67, %s81
      %p83 = scmp.eq.s32.totalorder %s24, 0
      %p84 = por %p82, %p83
      %s86 = sadd.s32 %s85, 1
      %p89 = scmp.eq.s32.totalorder %s18, 2
      %p90 = scmp.ne.s32.totalorder %s85, %s87
      %p91 = scmp.eq.s32.totalorder %s18, 0
      %p92 = por %p90, %p91
      %p93 = scmp.ne.s32.totalorder %s85, %s87
      %p94 = scmp.eq.s32.totalorder %s23, 2
      %p95 = por %p93, %p94
      %p96 = scmp.ne.s32.totalorder %s87, %s88
      %p97 = scmp.eq.s32.totalorder %s23, 0
      %p98 = por %p96, %p97
      %p99 = scmp.ne.s32.totalorder %s87, %s88
      %p100 = scmp.eq.s32.totalorder %s24, 2
      %p101 = por %p99, %p100
      %p103 = scmp.ne.s32.totalorder %s88, %s102
      %p104 = scmp.eq.s32.totalorder %s24, 0
      %p105 = por %p103, %p104
      %s106 = ssub.s32 %s26, 1
      %p107 = scmp.gt.s32.totalorder %s106, 0
      %s108 = scalar_select %p107, %s106, 0
      %p109 = scmp.lt.s32.totalorder %s108, 0
      %s110 = scalar_select %p109, %s108, 0
      %s111 = ssub.s32 %s33, 1
      %p112 = scmp.gt.s32.totalorder %s111, 0
      %s113 = scalar_select %p112, %s111, 0
      %p114 = scmp.lt.s32.totalorder %s113, 0
      %s115 = scalar_select %p114, %s113, 0
      %s116 = ssub.s32 %s110, %s115
      %p117 = scmp.eq.s32.totalorder %s116, 0
      %s119 = sadd.s32 %s118, 1
      %s120 = scalar_select %p117, %s118, %s119
      %p123 = pneg %p117
      %p124 = scmp.eq.s32.totalorder %s18, 2
      %p125 = por %p123, %p124
      %p126 = scmp.ne.s32.totalorder %s118, %s121
      %p127 = scmp.eq.s32.totalorder %s18, 0
      %p128 = por %p126, %p127
      %p129 = scmp.ne.s32.totalorder %s118, %s121
      %p130 = scmp.eq.s32.totalorder %s23, 2
      %p131 = por %p129, %p130
      %p132 = scmp.ne.s32.totalorder %s121, %s122
      %p133 = scmp.eq.s32.totalorder %s23, 0
      %p134 = por %p132, %p133
      %p135 = scmp.ne.s32.totalorder %s121, %s122
      %p136 = scmp.eq.s32.totalorder %s24, 2
      %p137 = por %p135, %p136
      %p139 = scmp.ne.s32.totalorder %s122, %s138
      %p140 = scmp.eq.s32.totalorder %s24, 0
      %p141 = por %p139, %p140
      %s142 = ssub.s32 %s26, 1
      %p143 = scmp.gt.s32.totalorder %s142, 0
      %s144 = scalar_select %p143, %s142, 0
      %p145 = scmp.lt.s32.totalorder %s144, 0
      %s146 = scalar_select %p145, %s144, 0
      %s147 = ssub.s32 %s33, 1
      %p148 = scmp.gt.s32.totalorder %s147, 0
      %s149 = scalar_select %p148, %s147, 0
      %p150 = scmp.lt.s32.totalorder %s149, 0
      %s151 = scalar_select %p150, %s149, 0
      %s152 = ssub.s32 %s146, %s151
      %p153 = scmp.eq.s32.totalorder %s152, 0
      %s155 = sadd.s32 %s154, 1
      %s156 = scalar_select %p153, %s154, %s155
      %p159 = pneg %p153
      %p160 = scmp.eq.s32.totalorder %s18, 2
      %p161 = por %p159, %p160
      %p162 = scmp.ne.s32.totalorder %s154, %s157
      %p163 = scmp.eq.s32.totalorder %s18, 0
      %p164 = por %p162, %p163
      %p165 = scmp.ne.s32.totalorder %s154, %s157
      %p166 = scmp.eq.s32.totalorder %s23, 2
      %p167 = por %p165, %p166
      %p168 = scmp.ne.s32.totalorder %s157, %s158
      %p169 = scmp.eq.s32.totalorder %s23, 0
      %p170 = por %p168, %p169
      %p171 = scmp.ne.s32.totalorder %s157, %s158
      %p172 = scmp.eq.s32.totalorder %s24, 2
      %p173 = por %p171, %p172
      %p175 = scmp.ne.s32.totalorder %s158, %s174
      %p176 = scmp.eq.s32.totalorder %s24, 0
      %p177 = por %p175, %p176
      %s179 = sadd.s32 %s178, 1
      %p182 = scmp.eq.s32.totalorder %s18, 2
      %p183 = scmp.ne.s32.totalorder %s178, %s180
      %p184 = scmp.eq.s32.totalorder %s18, 0
      %p185 = por %p183, %p184
      %p186 = scmp.ne.s32.totalorder %s178, %s180
      %p187 = scmp.eq.s32.totalorder %s23, 2
      %p188 = por %p186, %p187
      %p189 = scmp.ne.s32.totalorder %s180, %s181
      %p190 = scmp.eq.s32.totalorder %s23, 0
      %p191 = por %p189, %p190
      %p192 = scmp.ne.s32.totalorder %s180, %s181
      %p193 = scmp.eq.s32.totalorder %s24, 2
      %p194 = por %p192, %p193
      %p196 = scmp.ne.s32.totalorder %s181, %s195
      %p197 = scmp.eq.s32.totalorder %s24, 0
      %p198 = por %p196, %p197
      %s200 = sadd.s32 %s199, 1
      %p203 = scmp.eq.s32.totalorder %s18, 2
      %p204 = scmp.ne.s32.totalorder %s199, %s201
      %p205 = scmp.eq.s32.totalorder %s18, 0
      %p206 = por %p204, %p205
      %p207 = scmp.ne.s32.totalorder %s199, %s201
      %p208 = scmp.eq.s32.totalorder %s23, 2
      %p209 = por %p207, %p208
      %p210 = scmp.ne.s32.totalorder %s201, %s202
      %p211 = scmp.eq.s32.totalorder %s23, 0
      %p212 = por %p210, %p211
      %p213 = scmp.ne.s32.totalorder %s201, %s202
      %p214 = scmp.eq.s32.totalorder %s24, 2
      %p215 = por %p213, %p214
      %p217 = scmp.ne.s32.totalorder %s202, %s216
      %p218 = scmp.eq.s32.totalorder %s24, 0
      %p219 = por %p217, %p218
      %s220 = ssub.s32 %s25, %s37
      %p221 = scmp.eq.s32.totalorder %s220, 0
      %s223 = sadd.s32 %s222, 1
      %s224 = scalar_select %p221, %s222, %s223
      %p227 = pneg %p221
      %p228 = scmp.eq.s32.totalorder %s18, 2
      %p229 = por %p227, %p228
      %p230 = scmp.ne.s32.totalorder %s222, %s225
      %p231 = scmp.eq.s32.totalorder %s18, 0
      %p232 = por %p230, %p231
      %p233 = scmp.ne.s32.totalorder %s222, %s225
      %p234 = scmp.eq.s32.totalorder %s23, 2
      %p235 = por %p233, %p234
      %p236 = scmp.ne.s32.totalorder %s225, %s226
      %p237 = scmp.eq.s32.totalorder %s23, 0
      %p238 = por %p236, %p237
      %p239 = scmp.ne.s32.totalorder %s225, %s226
      %p240 = scmp.eq.s32.totalorder %s24, 2
      %p241 = por %p239, %p240
      %p243 = scmp.ne.s32.totalorder %s226, %s242
      %p244 = scmp.eq.s32.totalorder %s24, 0
      %p245 = por %p243, %p244
      %p246 = scmp.le.s32.totalorder 1, %s18
      %p247 = scmp.lt.s32.totalorder %s18, 4
      %p248 = pnand %p246, %p247
      %p249 = pneg %p248
      // Predicated region
      $region9: #{mlp_forward.1} parent=5 // pred_check
        _
      $region10: #{mlp_forward.1} parent=5 // pred_check_branch
        %251 = sbr.rel (%p248) target = $region12
      $region11: #{mlp_forward.1} parent=5 // pred_region
        %s252 = ssub.s32 %s18, 1
        // Predicated region
        $region13: #{mlp_forward.1} parent=11 // pred_check
          %p253 = pneg %p56
        $region14: #{mlp_forward.1} parent=11 // pred_check_branch
          %255 = sbr.rel (%p253) target = $region16
        $region15: #{mlp_forward.1} parent=11 // pred_region
          %p256 = scmp.lt.s32.totalorder %s27, 0
          %s257 = scalar_select %p256, %s27, 0
          %s258 = smul.addr %s257, 8
          %s259 = scalar_lea.vmem %s0, %s258
        $region16: #{mlp_forward.1} parent=11 // pred_fallthru
          _
        // Predicated region
        $region17: #{mlp_forward.1} parent=11 // pred_check
          %p260 = pneg %p77
        $region18: #{mlp_forward.1} parent=11 // pred_check_branch
          %262 = sbr.rel (%p260) target = $region20
        $region19: #{mlp_forward.1} parent=11 // pred_region
          %264 = vsyncadd [#allocation4], 0
          %s265 = sshll.u32 %s1, 4
          %s266 = int_to_ptr.hbm [resolvable:$true] %s265
          %s267 = sshll.u32 [#allocation3], 4
          %s268 = int_to_ptr.vmem [resolvable:$true] %s267
          %273 = dma.hbm_to_vmem [thread:$0]  %s266, 2048, %s268, [#allocation4], 128, 128, 8
        $region20: #{mlp_forward.1} parent=11 // pred_fallthru
          _
        // Predicated region
        $region21: #{mlp_forward.1} parent=11 // pred_check
          %p274 = pneg %p98
        $region22: #{mlp_forward.1} parent=11 // pred_check_branch
          %276 = sbr.rel (%p274) target = $region24
        $region23: #{mlp_forward.1} parent=11 // pred_region
          _
        $region24: #{mlp_forward.1} parent=11 // pred_fallthru
          _
        // Predicated region
        $region25: #{mlp_forward.1} parent=11 // pred_check
          %p277 = pneg %p191
        $region26: #{mlp_forward.1} parent=11 // pred_check_branch
          %279 = sbr.rel (%p277) target = $region28
        $region27: #{mlp_forward.1} parent=11 // pred_region
          %281 = vsyncadd [#allocation7], 0
          %s282 = sshll.u32 %s5, 4
          %s283 = int_to_ptr.hbm [resolvable:$true] %s282
          %s284 = sshll.u32 [#allocation8], 4
          %s285 = int_to_ptr.vmem [resolvable:$true] %s284
          %290 = dma.hbm_to_vmem [thread:$0]  %s283, 2048, %s285, [#allocation7], 128, 128, 8
        $region28: #{mlp_forward.1} parent=11 // pred_fallthru
          _
        // Predicated region
        $region29: #{mlp_forward.1} parent=11 // pred_check
          %p291 = pneg %p212
        $region30: #{mlp_forward.1} parent=11 // pred_check_branch
          %293 = sbr.rel (%p291) target = $region32
        $region31: #{mlp_forward.1} parent=11 // pred_region
          _
        $region32: #{mlp_forward.1} parent=11 // pred_fallthru
          _
      $region12: #{mlp_forward.1} parent=5 // pred_fallthru
        _
      %p294 = scmp.lt.s32.totalorder %s18, 3
      // Predicated region
      $region33: #{mlp_forward.1} parent=5 // pred_check
        %p295 = pneg %p294
      $region34: #{mlp_forward.1} parent=5 // pred_check_branch
        %297 = sbr.rel (%p295) target = $region36
      $region35: #{mlp_forward.1} parent=5 // pred_region
        // Predicated region
        $region37: #{mlp_forward.1} parent=35 // pred_check
          %p298 = pneg %p128
        $region38: #{mlp_forward.1} parent=35 // pred_check_branch
          %300 = sbr.rel (%p298) target = $region40
        $region39: #{mlp_forward.1} parent=35 // pred_region
          %s301 = sand.u32 %s18, 1
          %s302 = scalar_lea.sflag [#allocation7], %s301
          %s303 = sand.u32 %s118, 1
          %s304 = smul.addr %s303, 128
          %s305 = scalar_lea.vmem [#allocation6], %s304
          %s306 = ssub.s32 %s26, 1
          %p307 = scmp.gt.s32.totalorder %s306, 0
          %s308 = scalar_select %p307, %s306, 0
          %p309 = scmp.lt.s32.totalorder %s308, 0
          %s310 = scalar_select %p309, %s308, 0
          %312 = vsyncadd %s302, 0
          %s313 = smul.addr %s310, 16
          %s314 = smul.addr %s313, 8
          %s315 = scalar_lea.hbm %s3, %s314
          %s316 = sshll.u32 %s315, 4
          %s317 = int_to_ptr.hbm [resolvable:$true] %s316
          %s318 = sshll.u32 %s305, 4
          %s319 = int_to_ptr.vmem [resolvable:$true] %s318
          %324 = dma.hbm_to_vmem [thread:$0]  %s317, 2048, %s319, %s302, 128, 128, 8
        $region40: #{mlp_forward.1} parent=35 // pred_fallthru
          _
        // Predicated region
        $region41: #{mlp_forward.1} parent=35 // pred_check
          %p325 = pneg %p164
        $region42: #{mlp_forward.1} parent=35 // pred_check_branch
          %327 = sbr.rel (%p325) target = $region44
        $region43: #{mlp_forward.1} parent=35 // pred_region
          %s328 = ssub.s32 %s26, 1
          %p329 = scmp.gt.s32.totalorder %s328, 0
          %s330 = scalar_select %p329, %s328, 0
          %p331 = scmp.lt.s32.totalorder %s330, 0
          %s332 = scalar_select %p331, %s330, 0
          %p333 = scmp.lt.s32.totalorder %s332, 0
          %s334 = scalar_select %p333, %s332, 0
          %s335 = scalar_lea.vmem %s4, %s334
          %s336 = ssub.s32 %s26, 1
          %p337 = scmp.gt.s32.totalorder %s336, 0
          %s338 = scalar_select %p337, %s336, 0
          %p339 = scmp.lt.s32.totalorder %s338, 0
          %s340 = scalar_select %p339, %s338, 0
        $region44: #{mlp_forward.1} parent=35 // pred_fallthru
          _
      $region36: #{mlp_forward.1} parent=5 // pred_fallthru
        _
      %p341 = scmp.le.s32.totalorder 1, %s18
      %p342 = scmp.lt.s32.totalorder %s18, 4
      %p343 = pnand %p341, %p342
      %p344 = pneg %p343
      // Predicated region
      $region45: #{mlp_forward.1} parent=5 // pred_check
        _
      $region46: #{mlp_forward.1} parent=5 // pred_check_branch
        %346 = sbr.rel (%p343) target = $region48
      $region47: #{mlp_forward.1} parent=5 // pred_region
        %s347 = ssub.s32 %s18, 1
        // Predicated region
        $region49: #{mlp_forward.1} parent=47 // pred_check
          %p348 = pneg %p77
        $region50: #{mlp_forward.1} parent=47 // pred_check_branch
          %350 = sbr.rel (%p348) target = $region52
        $region51: #{mlp_forward.1} parent=47 // pred_region
          %352 = dma.done [#allocation4], 2048
        $region52: #{mlp_forward.1} parent=47 // pred_fallthru
          _
        %s353 = sand.u32 %s23, 1
        %s354 = scalar_lea.sflag [#allocation7], %s353
        %s355 = sand.u32 %s121, 1
        %s356 = smul.addr %s355, 128
        %s357 = scalar_lea.vmem [#allocation6], %s356
        // Predicated region
        $region53: #{mlp_forward.1} parent=47 // pred_check
          %p358 = pneg %p134
        $region54: #{mlp_forward.1} parent=47 // pred_check_branch
          %360 = sbr.rel (%p358) target = $region56
        $region55: #{mlp_forward.1} parent=47 // pred_region
          %362 = dma.done %s354, 2048
        $region56: #{mlp_forward.1} parent=47 // pred_fallthru
          _
        // Predicated region
        $region57: #{mlp_forward.1} parent=47 // pred_check
          %p363 = pneg %p191
        $region58: #{mlp_forward.1} parent=47 // pred_check_branch
          %365 = sbr.rel (%p363) target = $region60
        $region59: #{mlp_forward.1} parent=47 // pred_region
          %367 = dma.done [#allocation7], 2048
        $region60: #{mlp_forward.1} parent=47 // pred_fallthru
          _
        %p368 = scmp.lt.s32.totalorder %s27, 0
        %s369 = scalar_select %p368, %s27, 0
        %s370 = smul.addr %s369, 8
        %s371 = scalar_lea.vmem %s0, %s370
        %p372 = pneg %p56
        %p373 = pneg %p53
        %p374 = pneg %p77
        %p375 = pneg %p74
        %p376 = pneg %p98
        %p377 = pneg %p95
        %s378 = sand.u32 %s23, 1
        %s379 = scalar_lea.sflag [#allocation7], %s378
        %s380 = sand.u32 %s121, 1
        %s381 = smul.addr %s380, 128
        %s382 = scalar_lea.vmem [#allocation6], %s381
        %p383 = pneg %p134
        %p384 = pneg %p131
        %s385 = ssub.s32 %s28, 1
        %p386 = scmp.gt.s32.totalorder %s385, 0
        %s387 = scalar_select %p386, %s385, 0
        %p388 = scmp.lt.s32.totalorder %s387, 0
        %s389 = scalar_select %p388, %s387, 0
        %p390 = scmp.lt.s32.totalorder %s389, 0
        %s391 = scalar_select %p390, %s389, 0
        %s392 = scalar_lea.vmem %s4, %s391
        %p393 = pneg %p170
        %p394 = pneg %p167
        %p395 = pneg %p191
        %p396 = pneg %p188
        %p397 = pneg %p212
        %p398 = pneg %p209
        %p399 = pneg %p238
        %p400 = pneg %p235
        %p401 = scmp.lt.s32.totalorder %s27, 0
        %s402 = scalar_select %p401, %s27, 0
        %s403 = smul.addr %s402, 8
        %s404 = scalar_lea.vmem %s0, %s403
        %s405 = ssub.s32 %s28, 1
        %p406 = scmp.gt.s32.totalorder %s405, 0
        %s407 = scalar_select %p406, %s405, 0
        %p408 = scmp.lt.s32.totalorder %s407, 0
        %s409 = scalar_select %p408, %s407, 0
        %s410 = ssub.s32 %s28, 1
        %p411 = scmp.gt.s32.totalorder %s410, 0
        %s412 = scalar_select %p411, %s410, 0
        %p413 = scmp.lt.s32.totalorder %s412, 0
        %s414 = scalar_select %p413, %s412, 0
        %p415 = scmp.lt.s32.totalorder %s414, 0
        %s416 = scalar_select %p415, %s414, 0
        %s417 = scalar_lea.vmem %s4, %s416
        %s418 = ssub.s32 %s28, 1
        %p419 = scmp.gt.s32.totalorder %s418, 0
        %s420 = scalar_select %p419, %s418, 0
        %p421 = scmp.lt.s32.totalorder %s420, 0
        %s422 = scalar_select %p421, %s420, 0
        %p423 = scmp.eq.s32.totalorder %s28, 0
        // Predicated region
        $region61: #{mlp_forward.1} parent=47 // pred_check
          %p424 = pneg %p423
        $region62: #{mlp_forward.1} parent=47 // pred_check_branch
          %426 = sbr.rel (%p424) target = $region64
        $region63: #{mlp_forward.1} parent=47 // pred_region
          %v427 = vld [vmem:[%s404] sm:$0xff]
          %v428 = vld [vmem:[#allocation3] sm:$0xff]
          %v429 = vld [vmem:[#allocation3 + $0x8] sm:$0xff]
          %v430 = vld [vmem:[#allocation3 + $0x10] sm:$0xff]
          %v431 = vld [vmem:[#allocation3 + $0x18] sm:$0xff]
          %v432 = vld [vmem:[#allocation3 + $0x20] sm:$0xff]
          %v433 = vld [vmem:[#allocation3 + $0x28] sm:$0xff]
          %v434 = vld [vmem:[#allocation3 + $0x30] sm:$0xff]
          %v435 = vld [vmem:[#allocation3 + $0x38] sm:$0xff]
          %v436 = vld [vmem:[#allocation3 + $0x40] sm:$0xff]
          %v437 = vld [vmem:[#allocation3 + $0x48] sm:$0xff]
          %v438 = vld [vmem:[#allocation3 + $0x50] sm:$0xff]
          %v439 = vld [vmem:[#allocation3 + $0x58] sm:$0xff]
          %v440 = vld [vmem:[#allocation3 + $0x60] sm:$0xff]
          %v441 = vld [vmem:[#allocation3 + $0x68] sm:$0xff]
          %v442 = vld [vmem:[#allocation3 + $0x70] sm:$0xff]
          %v443 = vld [vmem:[#allocation3 + $0x78] sm:$0xff]
          %v444 = vld [vmem:[%s2] sm:$0x1]
          %v446 = vperm.slane %v444, 0
          %448 = vmatpush.msra.mxu0 %v443
          %449 = vmatpush.msra.mxu0 %v442
          %450 = vmatpush.msra.mxu0 %v441
          %451 = vmatpush.msra.mxu0 %v440
          %452 = vmatpush.msra.mxu0 %v439
          %453 = vmatpush.msra.mxu0 %v438
          %454 = vmatpush.msra.mxu0 %v437
          %455 = vmatpush.msra.mxu0 %v436
          %456 = vmatpush.msra.mxu0 %v435
          %457 = vmatpush.msra.mxu0 %v434
          %458 = vmatpush.msra.mxu0 %v433
          %459 = vmatpush.msra.mxu0 %v432
          %460 = vmatpush.msra.mxu0 %v431
          %461 = vmatpush.msra.mxu0 %v430
          %462 = vmatpush.msra.mxu0 %v429
          %463 = vmatpush.msra.mxu0 %v428
          %464 = vmatmul.f32.gmra.mxu0 %v427
          %v465 = vpop.f32.mrf.mxu0
          %v466 = vadd.f32 %v446, %v465
          %467 = vdwg.mxu0
          %v468 = vmax.f32 %v466, 0.0
          %469 = vst [vmem:[#allocation2] sm:$0xff] %v468
        $region64: #{mlp_forward.1} parent=47 // pred_fallthru
          _
        %p470 = scmp.gt.s32.totalorder %s28, 0
        %p471 = scmp.lt.s32.totalorder %s28, 2
        %p472 = pnand %p470, %p471
        %p473 = pneg %p472
        // Predicated region
        $region65: #{mlp_forward.1} parent=47 // pred_check
          _
        $region66: #{mlp_forward.1} parent=47 // pred_check_branch
          %475 = sbr.rel (%p472) target = $region68
        $region67: #{mlp_forward.1} parent=47 // pred_region
          %v476 = vld [vmem:[#allocation2] sm:$0xff]
          %v477 = vld [vmem:[%s357] sm:$0xff]
          %v478 = vld [vmem:[%s357 + $0x8] sm:$0xff]
          %v479 = vld [vmem:[%s357 + $0x10] sm:$0xff]
          %v480 = vld [vmem:[%s357 + $0x18] sm:$0xff]
          %v481 = vld [vmem:[%s357 + $0x20] sm:$0xff]
          %v482 = vld [vmem:[%s357 + $0x28] sm:$0xff]
          %v483 = vld [vmem:[%s357 + $0x30] sm:$0xff]
          %v484 = vld [vmem:[%s357 + $0x38] sm:$0xff]
          %v485 = vld [vmem:[%s357 + $0x40] sm:$0xff]
          %v486 = vld [vmem:[%s357 + $0x48] sm:$0xff]
          %v487 = vld [vmem:[%s357 + $0x50] sm:$0xff]
          %v488 = vld [vmem:[%s357 + $0x58] sm:$0xff]
          %v489 = vld [vmem:[%s357 + $0x60] sm:$0xff]
          %v490 = vld [vmem:[%s357 + $0x68] sm:$0xff]
          %v491 = vld [vmem:[%s357 + $0x70] sm:$0xff]
          %v492 = vld [vmem:[%s357 + $0x78] sm:$0xff]
          %v493 = vld [vmem:[%s417] sm:$0x1]
          %v495 = vperm.slane %v493, 0
          %497 = vmatpush.msra.mxu0 %v492
          %498 = vmatpush.msra.mxu0 %v491
          %499 = vmatpush.msra.mxu0 %v490
          %500 = vmatpush.msra.mxu0 %v489
          %501 = vmatpush.msra.mxu0 %v488
          %502 = vmatpush.msra.mxu0 %v487
          %503 = vmatpush.msra.mxu0 %v486
          %504 = vmatpush.msra.mxu0 %v485
          %505 = vmatpush.msra.mxu0 %v484
          %506 = vmatpush.msra.mxu0 %v483
          %507 = vmatpush.msra.mxu0 %v482
          %508 = vmatpush.msra.mxu0 %v481
          %509 = vmatpush.msra.mxu0 %v480
          %510 = vmatpush.msra.mxu0 %v479
          %511 = vmatpush.msra.mxu0 %v478
          %512 = vmatpush.msra.mxu0 %v477
          %513 = vmatmul.f32.gmra.mxu0 %v476
          %v514 = vpop.f32.mrf.mxu0
          %v515 = vadd.f32 %v495, %v514
          %516 = vdwg.mxu0
          %v517 = vmax.f32 %v515, 0.0
          %518 = vst [vmem:[#allocation2] sm:$0xff] %v517
        $region68: #{mlp_forward.1} parent=47 // pred_fallthru
          _
        %p519 = scmp.eq.s32.totalorder %s28, 2
        // Predicated region
        $region69: #{mlp_forward.1} parent=47 // pred_check
          %p520 = pneg %p519
        $region70: #{mlp_forward.1} parent=47 // pred_check_branch
          %522 = sbr.rel (%p520) target = $region72
        $region71: #{mlp_forward.1} parent=47 // pred_region
          %v523 = vld [vmem:[#allocation2] sm:$0xff]
          %v524 = vld [vmem:[#allocation8] sm:$0xff]
          %v525 = vld [vmem:[#allocation8 + $0x8] sm:$0xff]
          %v526 = vld [vmem:[#allocation8 + $0x10] sm:$0xff]
          %v527 = vld [vmem:[#allocation8 + $0x18] sm:$0xff]
          %v528 = vld [vmem:[#allocation8 + $0x20] sm:$0xff]
          %v529 = vld [vmem:[#allocation8 + $0x28] sm:$0xff]
          %v530 = vld [vmem:[#allocation8 + $0x30] sm:$0xff]
          %v531 = vld [vmem:[#allocation8 + $0x38] sm:$0xff]
          %v532 = vld [vmem:[#allocation8 + $0x40] sm:$0xff]
          %v533 = vld [vmem:[#allocation8 + $0x48] sm:$0xff]
          %v534 = vld [vmem:[#allocation8 + $0x50] sm:$0xff]
          %v535 = vld [vmem:[#allocation8 + $0x58] sm:$0xff]
          %v536 = vld [vmem:[#allocation8 + $0x60] sm:$0xff]
          %v537 = vld [vmem:[#allocation8 + $0x68] sm:$0xff]
          %v538 = vld [vmem:[#allocation8 + $0x70] sm:$0xff]
          %v539 = vld [vmem:[#allocation8 + $0x78] sm:$0xff]
          %v540 = vld [vmem:[%s6] sm:$0x1]
          %v542 = vperm.slane %v540, 0
          %544 = vmatpush.msra.mxu0 %v539
          %545 = vmatpush.msra.mxu0 %v538
          %546 = vmatpush.msra.mxu0 %v537
          %547 = vmatpush.msra.mxu0 %v536
          %548 = vmatpush.msra.mxu0 %v535
          %549 = vmatpush.msra.mxu0 %v534
          %550 = vmatpush.msra.mxu0 %v533
          %551 = vmatpush.msra.mxu0 %v532
          %552 = vmatpush.msra.mxu0 %v531
          %553 = vmatpush.msra.mxu0 %v530
          %554 = vmatpush.msra.mxu0 %v529
          %555 = vmatpush.msra.mxu0 %v528
          %556 = vmatpush.msra.mxu0 %v527
          %557 = vmatpush.msra.mxu0 %v526
          %558 = vmatpush.msra.mxu0 %v525
          %559 = vmatpush.msra.mxu0 %v524
          %560 = vmatmul.f32.gmra.mxu0 %v523
          %v561 = vpop.f32.mrf.mxu0
          %v562 = vadd.f32 %v542, %v561
          %563 = vdwg.mxu0
          %564 = vst [vmem:[#allocation9] sm:$0xff] %v562
        $region72: #{mlp_forward.1} parent=47 // pred_fallthru
          _
        // Predicated region
        $region73: #{mlp_forward.1} parent=47 // pred_check
          %p565 = pneg %p235
        $region74: #{mlp_forward.1} parent=47 // pred_check_branch
          %567 = sbr.rel (%p565) target = $region76
        $region75: #{mlp_forward.1} parent=47 // pred_region
          %569 = vsyncadd [#allocation5], 0
          %s570 = smul.addr %s27, 8
          %s571 = scalar_lea.hbm %s7, %s570
          %s573 = sshll.u32 [#allocation9], 4
          %s574 = int_to_ptr.vmem [resolvable:$true] %s573
          %s575 = sshll.u32 %s571, 4
          %s576 = int_to_ptr.hbm [resolvable:$true] %s575
          %578 = dma.vmem_to_hbm [thread:$0]  %s574, 128, %s576, [#allocation5]
        $region76: #{mlp_forward.1} parent=47 // pred_fallthru
          _
        // Predicated region
        $region77: #{mlp_forward.1} parent=47 // pred_check
          %p579 = pneg %p235
        $region78: #{mlp_forward.1} parent=47 // pred_check_branch
          %581 = sbr.rel (%p579) target = $region80
        $region79: #{mlp_forward.1} parent=47 // pred_region
          %583 = dma.done [#allocation5], 128
        $region80: #{mlp_forward.1} parent=47 // pred_fallthru
          _
      $region48: #{mlp_forward.1} parent=5 // pred_fallthru
        _
      %p584 = scmp.le.s32.totalorder 2, %s18
      // Predicated region
      $region81: #{mlp_forward.1} parent=5 // pred_check
        %p585 = pneg %p584
      $region82: #{mlp_forward.1} parent=5 // pred_check_branch
        %587 = sbr.rel (%p585) target = $region84
      $region83: #{mlp_forward.1} parent=5 // pred_region
        %s588 = ssub.s32 %s18, 2
      $region84: #{mlp_forward.1} parent=5 // pred_fallthru
        _
    $region6: #{mlp_forward.1} parent=1 // loop_footer
      %s22 = sadd.s32 1, %s18
    $region7: #{mlp_forward.1} parent=1 // loop_footer_branch
      %17 = sbr.rel target = $region3
    $region8: #{mlp_forward.1} parent=1 // loop_exit
      _
    %589 = vsyncpa [#allocation4], 1
    %s590 = scalar_lea.sflag [#allocation4], 1
    %591 = vsyncpa %s590, 1
    %592 = vsyncpa [#allocation7], 1
    %s593 = scalar_lea.sflag [#allocation7], 1
    %594 = vsyncpa %s593, 1
    %595 = vsyncpa [#allocation5], 1
    %s596 = scalar_lea.sflag [#allocation5], 1
    %597 = vsyncpa %s596, 1

</llo_original>
